<compile_context>
chip_gen: v5e
topology: v5e:2x2
jax: 0.10.0
libtpu: 0.0.40
codegen_flags: <defaults>
</compile_context>

<pallas_src>
import functools
import math

import jax
import jax.numpy as jnp
import numpy as np
from jax import lax
from jax.experimental import pallas as pl
from jax.experimental.pallas import tpu as pltpu


def _fused_shortcut_kernel(x_ref, mask_ref, *rest,
                           layer_shifts, layer_relu, layer_cin):
    """Whole conv(+ReLU) chain for one batch element, channels-first flat layout.

    x_ref:    (C0, M)   flattened input for this batch element (M = H*W lanes)
    mask_ref: (T, M)    f32 0/1 border masks, one row per (layer, tap)
    rest:     w_0, b_0, w_1, b_1, ..., out_ref, patch_scratch
              w_i: (Cout, KH*KW*Cin_i) packed weights; b_i: (Cout, 1)
    """
    patch_ref = rest[-1]          # VMEM scratch (K_max, M) f32
    o_ref = rest[-2]              # (C_last, M)
    wb = rest[:-2]

    y = x_ref[...].astype(jnp.float32)                    # (C, M)
    mask_row = 0
    for li, (shifts, relu, cin) in enumerate(
            zip(layer_shifts, layer_relu, layer_cin)):
        # Build the (K, M) patch matrix: one lane-rolled, border-masked copy of
        # the current activation per conv tap, stacked along sublanes.
        for t, s in enumerate(shifts):
            shifted = pltpu.roll(y, s, 1) if s else y      # XLU lane rotate
            m = mask_ref[pl.ds(mask_row + t, 1), :]        # (1, M) 0/1 mask
            patch_ref[pl.ds(t * cin, cin), :] = shifted * m
        mask_row += len(shifts)

        k = len(shifts) * cin
        w = wb[2 * li][...].astype(jnp.float32)            # (Cout, K)
        b = wb[2 * li + 1][...]                            # (Cout, 1)
        # Single MXU matmul per layer: (Cout, K) @ (K, M) -> (Cout, M)
        y = lax.dot_general(w, patch_ref[pl.ds(0, k), :],
                            (((1,), (0,)), ((), ())),
                            preferred_element_type=jnp.float32)
        y = y + b                                          # bias over lanes
        if relu:
            y = jnp.maximum(y, 0.0)

    o_ref[...] = y.astype(o_ref.dtype)                     # lane-dense store


class ShortcutConv2dPallas:
    """JAX/Pallas port of mmdet ShortcutConv2d, fused into one TPU kernel."""

    def __init__(self, in_channels, out_channels, kernel_sizes, paddings,
                 activation_last=False, key=None):
        assert len(kernel_sizes) == len(paddings)
        if key is None:
            key = jax.random.PRNGKey(42)
        self.in_channels = in_channels
        self.out_channels = out_channels
        self.layer_cfg = []       # (ks, pad, relu, cin)
        self.params_hwio = []     # (w_hwio, b) for the lax.conv reference
        self.params_packed = []   # (w_packed (Cout, ks*ks*cin), b (Cout, 1))
        for i, (ks, pad) in enumerate(zip(kernel_sizes, paddings)):
            inc = in_channels if i == 0 else out_channels
            key, wk, bk = jax.random.split(key, 3)
            fan_in = inc * ks * ks
            bound = 1.0 / math.sqrt(fan_in)   # PyTorch Conv2d default init range
            w = jax.random.uniform(wk, (ks, ks, inc, out_channels),
                                   jnp.float32, -bound, bound)   # HWIO
            b = jax.random.uniform(bk, (out_channels, 1), jnp.float32,
                                   -bound, bound)
            relu = (i < len(kernel_sizes) - 1) or activation_last
            wp = jnp.transpose(w, (3, 0, 1, 2)).reshape(out_channels,
                                                        ks * ks * inc)
            self.layer_cfg.append((ks, pad, relu, inc))
            self.params_hwio.append((w, b))
            self.params_packed.append((wp, b))

    def _spatial_plan(self, H, W):
        """Per-layer lane shifts + 0/1 border masks for a given spatial size."""
        M = H * W
        rows = np.arange(H).reshape(H, 1)
        cols = np.arange(W).reshape(1, W)
        layer_shifts = []
        mask_rows = []
        for ks, pad, _, _ in self.layer_cfg:
            # TODO(synk): only stride-1, size-preserving convs (2*pad == ks-1)
            # are fused here; other paddings change the spatial size per layer.
            assert 2 * pad == ks - 1, "fused kernel assumes 'same' padding"
            shifts = []
            for kh in range(ks):
                for kw in range(ks):
                    dh, dw = kh - pad, kw - pad
                    shifts.append((-(dh * W + dw)) % M)
                    valid = ((rows + dh >= 0) & (rows + dh < H) &
                             (cols + dw >= 0) & (cols + dw < W))
                    mask_rows.append(valid.astype(np.float32).reshape(1, M))
            layer_shifts.append(tuple(shifts))
        masks = jnp.asarray(np.concatenate(mask_rows, axis=0))   # (T, M)
        return tuple(layer_shifts), masks

    def __call__(self, x_nchw):
        N, C, H, W = x_nchw.shape
        assert C == self.in_channels
        M = H * W
        layer_shifts, masks = self._spatial_plan(H, W)
        layer_relu = tuple(cfg[2] for cfg in self.layer_cfg)
        layer_cin = tuple(cfg[3] for cfg in self.layer_cfg)
        k_max = max(len(s) * c for s, c in zip(layer_shifts, layer_cin))
        c_out = self.out_channels

        x_flat = x_nchw.reshape(N, C, M)   # free reshape, keeps NCHW ordering

        in_specs = [
            pl.BlockSpec((None, C, M), lambda n: (n, 0, 0)),
            pl.BlockSpec(masks.shape, lambda n: (0, 0)),
        ]
        flat_params = []
        for wp, b in self.params_packed:
            in_specs.append(pl.BlockSpec(wp.shape, lambda n: (0, 0)))
            in_specs.append(pl.BlockSpec(b.shape, lambda n: (0, 0)))
            flat_params.extend((wp, b))

        kernel = functools.partial(
            _fused_shortcut_kernel,
            layer_shifts=layer_shifts, layer_relu=layer_relu,
            layer_cin=layer_cin)

        out_flat = pl.pallas_call(
            kernel,
            out_shape=jax.ShapeDtypeStruct((N, c_out, M), x_nchw.dtype),
            grid_spec=pltpu.PrefetchScalarGridSpec(
                num_scalar_prefetch=0,
                grid=(N,),
                in_specs=in_specs,
                out_specs=pl.BlockSpec((None, c_out, M), lambda n: (n, 0, 0)),
                scratch_shapes=[pltpu.VMEM((k_max, M), jnp.float32)],
            ),
            compiler_params=pltpu.CompilerParams(
                dimension_semantics=("parallel",)),
        )(x_flat, masks, *flat_params)

        return out_flat.reshape(N, c_out, H, W)


def _reference_forward(mod, x_nchw):
    y = jnp.transpose(x_nchw, (0, 2, 3, 1))   # NHWC
    for (w, b), (ks, pad, relu, _) in zip(mod.params_hwio, mod.layer_cfg):
        y = lax.conv_general_dilated(
            y, w, window_strides=(1, 1),
            padding=[(pad, pad), (pad, pad)],
            dimension_numbers=("NHWC", "HWIO", "NHWC")) + b[:, 0]
        if relu:
            y = jnp.maximum(y, 0.0)
    return jnp.transpose(y, (0, 3, 1, 2))


if __name__ == "__main__":
    key = jax.random.PRNGKey(0)
    x = jax.random.normal(key, (2, 4, 16, 16), jnp.float32)   # NCHW

    # ShortcutConv2d(in_channels=4, out_channels=8,
    #                kernel_sizes=[3, 3], paddings=[1, 1], activation_last=False)
    mod = ShortcutConv2dPallas(4, 8, [3, 3], [1, 1], activation_last=False)

    y = mod(x)
    jax.block_until_ready(y)

    y_ref = _reference_forward(mod, x)
    assert y.shape == (2, 8, 16, 16), y.shape
    err = float(jnp.max(jnp.abs(y - y_ref)))
    assert jnp.allclose(y, y_ref, atol=1e-4, rtol=1e-4), f"mismatch {err}"
    print("KERNEL_OK")
</pallas_src>

<mosaic_0001>
module attributes {stable_mosaic.version = 11 : i64} {
  func.func @_fused_shortcut_kernel(%arg0: i32, %arg1: memref<1x4x256xf32, #tpu.memory_space<vmem>>, %arg2: memref<18x256xf32, #tpu.memory_space<vmem>>, %arg3: memref<8x36xf32, #tpu.memory_space<vmem>>, %arg4: memref<8x1xf32, #tpu.memory_space<vmem>>, %arg5: memref<8x72xf32, #tpu.memory_space<vmem>>, %arg6: memref<8x1xf32, #tpu.memory_space<vmem>>, %arg7: memref<1x8x256xf32, #tpu.memory_space<vmem>>, %arg8: memref<72x256xf32, #tpu.memory_space<vmem>>) attributes {dimension_semantics = [#tpu.dimension_semantics<parallel>], iteration_bounds = array<i64: 2>, scalar_prefetch = 0 : i64, scratch_operands = 1 : i64, tpu.core_type = #tpu.core_type<tc>, window_params = [{transform_indices = @transform_0, window_bounds = array<i64: 1, 4, 256>}, {pipeline_mode = #tpu.pipeline_mode<synchronous>, transform_indices = @transform_1, window_bounds = array<i64: 18, 256>}, {pipeline_mode = #tpu.pipeline_mode<synchronous>, transform_indices = @transform_2, window_bounds = array<i64: 8, 36>}, {pipeline_mode = #tpu.pipeline_mode<synchronous>, transform_indices = @transform_3, window_bounds = array<i64: 8, 1>}, {pipeline_mode = #tpu.pipeline_mode<synchronous>, transform_indices = @transform_4, window_bounds = array<i64: 8, 72>}, {pipeline_mode = #tpu.pipeline_mode<synchronous>, transform_indices = @transform_5, window_bounds = array<i64: 8, 1>}, {transform_indices = @transform_6, window_bounds = array<i64: 1, 8, 256>}]} {
    %c0 = arith.constant 0 : index
    %c0_0 = arith.constant 0 : index
    %c0_1 = arith.constant 0 : index
    %0 = vector.load %arg1[%c0, %c0_0, %c0_1] : memref<1x4x256xf32, #tpu.memory_space<vmem>>, vector<1x4x256xf32>
    %1 = vector.shape_cast %0 : vector<1x4x256xf32> to vector<4x256xf32>
    %c17_i32 = arith.constant 17 : i32
    %2 = tpu.dynamic_rotate %1 by %c17_i32 dim 1 : vector<4x256xf32>, i32 -> vector<4x256xf32>
    %c0_2 = arith.constant 0 : index
    %c0_3 = arith.constant 0 : index
    %3 = vector.load %arg2[%c0_2, %c0_3] : memref<18x256xf32, #tpu.memory_space<vmem>>, vector<1x256xf32>
    %4 = vector.broadcast %3 : vector<1x256xf32> to vector<4x256xf32>
    %5 = arith.mulf %2, %4 : vector<4x256xf32>
    %c0_4 = arith.constant 0 : index
    %c0_5 = arith.constant 0 : index
    %6 = vector.load %arg8[%c0_4, %c0_5] : memref<72x256xf32, #tpu.memory_space<vmem>>, vector<4x256xf32>
    tpu.vector_store %arg8[%c0_4, %c0_5], %5 {strides = array<i32>} : memref<72x256xf32, #tpu.memory_space<vmem>>, vector<4x256xf32>,
    %c16_i32 = arith.constant 16 : i32
    %7 = tpu.dynamic_rotate %1 by %c16_i32 dim 1 : vector<4x256xf32>, i32 -> vector<4x256xf32>
    %c1 = arith.constant 1 : index
    %c0_6 = arith.constant 0 : index
    %8 = vector.load %arg2[%c1, %c0_6] : memref<18x256xf32, #tpu.memory_space<vmem>>, vector<1x256xf32>
    %9 = vector.broadcast %8 : vector<1x256xf32> to vector<4x256xf32>
    %10 = arith.mulf %7, %9 : vector<4x256xf32>
    %c4 = arith.constant 4 : index
    %c0_7 = arith.constant 0 : index
    %11 = vector.load %arg8[%c4, %c0_7] : memref<72x256xf32, #tpu.memory_space<vmem>>, vector<4x256xf32>
    tpu.vector_store %arg8[%c4, %c0_7], %10 {strides = array<i32>} : memref<72x256xf32, #tpu.memory_space<vmem>>, vector<4x256xf32>,
    %c15_i32 = arith.constant 15 : i32
    %12 = tpu.dynamic_rotate %1 by %c15_i32 dim 1 : vector<4x256xf32>, i32 -> vector<4x256xf32>
    %c2 = arith.constant 2 : index
    %c0_8 = arith.constant 0 : index
    %13 = vector.load %arg2[%c2, %c0_8] : memref<18x256xf32, #tpu.memory_space<vmem>>, vector<1x256xf32>
    %14 = vector.broadcast %13 : vector<1x256xf32> to vector<4x256xf32>
    %15 = arith.mulf %12, %14 : vector<4x256xf32>
    %c8 = arith.constant 8 : index
    %c0_9 = arith.constant 0 : index
    %16 = vector.load %arg8[%c8, %c0_9] : memref<72x256xf32, #tpu.memory_space<vmem>>, vector<4x256xf32>
    tpu.vector_store %arg8[%c8, %c0_9], %15 {strides = array<i32>} : memref<72x256xf32, #tpu.memory_space<vmem>>, vector<4x256xf32>,
    %c1_i32 = arith.constant 1 : i32
    %17 = tpu.dynamic_rotate %1 by %c1_i32 dim 1 : vector<4x256xf32>, i32 -> vector<4x256xf32>
    %c3 = arith.constant 3 : index
    %c0_10 = arith.constant 0 : index
    %18 = vector.load %arg2[%c3, %c0_10] : memref<18x256xf32, #tpu.memory_space<vmem>>, vector<1x256xf32>
    %19 = vector.broadcast %18 : vector<1x256xf32> to vector<4x256xf32>
    %20 = arith.mulf %17, %19 : vector<4x256xf32>
    %c12 = arith.constant 12 : index
    %c0_11 = arith.constant 0 : index
    %21 = vector.load %arg8[%c12, %c0_11] : memref<72x256xf32, #tpu.memory_space<vmem>>, vector<4x256xf32>
    tpu.vector_store %arg8[%c12, %c0_11], %20 {strides = array<i32>} : memref<72x256xf32, #tpu.memory_space<vmem>>, vector<4x256xf32>,
    %c4_12 = arith.constant 4 : index
    %c0_13 = arith.constant 0 : index
    %22 = vector.load %arg2[%c4_12, %c0_13] : memref<18x256xf32, #tpu.memory_space<vmem>>, vector<1x256xf32>
    %23 = vector.broadcast %22 : vector<1x256xf32> to vector<4x256xf32>
    %24 = arith.mulf %1, %23 : vector<4x256xf32>
    %c16 = arith.constant 16 : index
    %c0_14 = arith.constant 0 : index
    %25 = vector.load %arg8[%c16, %c0_14] : memref<72x256xf32, #tpu.memory_space<vmem>>, vector<4x256xf32>
    tpu.vector_store %arg8[%c16, %c0_14], %24 {strides = array<i32>} : memref<72x256xf32, #tpu.memory_space<vmem>>, vector<4x256xf32>,
    %c255_i32 = arith.constant 255 : i32
    %26 = tpu.dynamic_rotate %1 by %c255_i32 dim 1 : vector<4x256xf32>, i32 -> vector<4x256xf32>
    %c5 = arith.constant 5 : index
    %c0_15 = arith.constant 0 : index
    %27 = vector.load %arg2[%c5, %c0_15] : memref<18x256xf32, #tpu.memory_space<vmem>>, vector<1x256xf32>
    %28 = vector.broadcast %27 : vector<1x256xf32> to vector<4x256xf32>
    %29 = arith.mulf %26, %28 : vector<4x256xf32>
    %c20 = arith.constant 20 : index
    %c0_16 = arith.constant 0 : index
    %30 = vector.load %arg8[%c20, %c0_16] : memref<72x256xf32, #tpu.memory_space<vmem>>, vector<4x256xf32>
    tpu.vector_store %arg8[%c20, %c0_16], %29 {strides = array<i32>} : memref<72x256xf32, #tpu.memory_space<vmem>>, vector<4x256xf32>,
    %c241_i32 = arith.constant 241 : i32
    %31 = tpu.dynamic_rotate %1 by %c241_i32 dim 1 : vector<4x256xf32>, i32 -> vector<4x256xf32>
    %c6 = arith.constant 6 : index
    %c0_17 = arith.constant 0 : index
    %32 = vector.load %arg2[%c6, %c0_17] : memref<18x256xf32, #tpu.memory_space<vmem>>, vector<1x256xf32>
    %33 = vector.broadcast %32 : vector<1x256xf32> to vector<4x256xf32>
    %34 = arith.mulf %31, %33 : vector<4x256xf32>
    %c24 = arith.constant 24 : index
    %c0_18 = arith.constant 0 : index
    %35 = vector.load %arg8[%c24, %c0_18] : memref<72x256xf32, #tpu.memory_space<vmem>>, vector<4x256xf32>
    tpu.vector_store %arg8[%c24, %c0_18], %34 {strides = array<i32>} : memref<72x256xf32, #tpu.memory_space<vmem>>, vector<4x256xf32>,
    %c240_i32 = arith.constant 240 : i32
    %36 = tpu.dynamic_rotate %1 by %c240_i32 dim 1 : vector<4x256xf32>, i32 -> vector<4x256xf32>
    %c7 = arith.constant 7 : index
    %c0_19 = arith.constant 0 : index
    %37 = vector.load %arg2[%c7, %c0_19] : memref<18x256xf32, #tpu.memory_space<vmem>>, vector<1x256xf32>
    %38 = vector.broadcast %37 : vector<1x256xf32> to vector<4x256xf32>
    %39 = arith.mulf %36, %38 : vector<4x256xf32>
    %c28 = arith.constant 28 : index
    %c0_20 = arith.constant 0 : index
    %40 = vector.load %arg8[%c28, %c0_20] : memref<72x256xf32, #tpu.memory_space<vmem>>, vector<4x256xf32>
    tpu.vector_store %arg8[%c28, %c0_20], %39 {strides = array<i32>} : memref<72x256xf32, #tpu.memory_space<vmem>>, vector<4x256xf32>,
    %c239_i32 = arith.constant 239 : i32
    %41 = tpu.dynamic_rotate %1 by %c239_i32 dim 1 : vector<4x256xf32>, i32 -> vector<4x256xf32>
    %c8_21 = arith.constant 8 : index
    %c0_22 = arith.constant 0 : index
    %42 = vector.load %arg2[%c8_21, %c0_22] : memref<18x256xf32, #tpu.memory_space<vmem>>, vector<1x256xf32>
    %43 = vector.broadcast %42 : vector<1x256xf32> to vector<4x256xf32>
    %44 = arith.mulf %41, %43 : vector<4x256xf32>
    %c32 = arith.constant 32 : index
    %c0_23 = arith.constant 0 : index
    %45 = vector.load %arg8[%c32, %c0_23] : memref<72x256xf32, #tpu.memory_space<vmem>>, vector<4x256xf32>
    tpu.vector_store %arg8[%c32, %c0_23], %44 {strides = array<i32>} : memref<72x256xf32, #tpu.memory_space<vmem>>, vector<4x256xf32>,
    %c0_24 = arith.constant 0 : index
    %c0_25 = arith.constant 0 : index
    %46 = vector.load %arg3[%c0_24, %c0_25] : memref<8x36xf32, #tpu.memory_space<vmem>>, vector<8x36xf32>
    %c0_26 = arith.constant 0 : index
    %c0_27 = arith.constant 0 : index
    %47 = vector.load %arg4[%c0_26, %c0_27] : memref<8x1xf32, #tpu.memory_space<vmem>>, vector<8x1xf32>
    %c0_28 = arith.constant 0 : index
    %c0_29 = arith.constant 0 : index
    %48 = vector.load %arg8[%c0_28, %c0_29] : memref<72x256xf32, #tpu.memory_space<vmem>>, vector<36x256xf32>
    %cst = arith.constant dense<0.000000e+00> : vector<8x256xf32>
    %49 = tpu.matmul %46, %48, %cst {dimension_numbers = #tpu.dot_dimension_numbers<[1], [0], [0], [1], [0, 0, 1, 1], [], []>} : vector<8x36xf32>, vector<36x256xf32>, vector<8x256xf32> -> vector<8x256xf32>
    %50 = vector.broadcast %47 : vector<8x1xf32> to vector<8x256xf32>
    %51 = arith.addf %49, %50 : vector<8x256xf32>
    %cst_30 = arith.constant 0.000000e+00 : f32
    %52 = vector.broadcast %cst_30 : f32 to vector<8x256xf32>
    %53 = arith.maximumf %51, %52 : vector<8x256xf32>
    %c17_i32_31 = arith.constant 17 : i32
    %54 = tpu.dynamic_rotate %53 by %c17_i32_31 dim 1 : vector<8x256xf32>, i32 -> vector<8x256xf32>
    %c9 = arith.constant 9 : index
    %c0_32 = arith.constant 0 : index
    %55 = vector.load %arg2[%c9, %c0_32] : memref<18x256xf32, #tpu.memory_space<vmem>>, vector<1x256xf32>
    %56 = vector.broadcast %55 : vector<1x256xf32> to vector<8x256xf32>
    %57 = arith.mulf %54, %56 : vector<8x256xf32>
    %c0_33 = arith.constant 0 : index
    %c0_34 = arith.constant 0 : index
    %58 = vector.load %arg8[%c0_33, %c0_34] : memref<72x256xf32, #tpu.memory_space<vmem>>, vector<8x256xf32>
    tpu.vector_store %arg8[%c0_33, %c0_34], %57 {strides = array<i32>} : memref<72x256xf32, #tpu.memory_space<vmem>>, vector<8x256xf32>,
    %c16_i32_35 = arith.constant 16 : i32
    %59 = tpu.dynamic_rotate %53 by %c16_i32_35 dim 1 : vector<8x256xf32>, i32 -> vector<8x256xf32>
    %c10 = arith.constant 10 : index
    %c0_36 = arith.constant 0 : index
    %60 = vector.load %arg2[%c10, %c0_36] : memref<18x256xf32, #tpu.memory_space<vmem>>, vector<1x256xf32>
    %61 = vector.broadcast %60 : vector<1x256xf32> to vector<8x256xf32>
    %62 = arith.mulf %59, %61 : vector<8x256xf32>
    %c8_37 = arith.constant 8 : index
    %c0_38 = arith.constant 0 : index
    %63 = vector.load %arg8[%c8_37, %c0_38] : memref<72x256xf32, #tpu.memory_space<vmem>>, vector<8x256xf32>
    tpu.vector_store %arg8[%c8_37, %c0_38], %62 {strides = array<i32>} : memref<72x256xf32, #tpu.memory_space<vmem>>, vector<8x256xf32>,
    %c15_i32_39 = arith.constant 15 : i32
    %64 = tpu.dynamic_rotate %53 by %c15_i32_39 dim 1 : vector<8x256xf32>, i32 -> vector<8x256xf32>
    %c11 = arith.constant 11 : index
    %c0_40 = arith.constant 0 : index
    %65 = vector.load %arg2[%c11, %c0_40] : memref<18x256xf32, #tpu.memory_space<vmem>>, vector<1x256xf32>
    %66 = vector.broadcast %65 : vector<1x256xf32> to vector<8x256xf32>
    %67 = arith.mulf %64, %66 : vector<8x256xf32>
    %c16_41 = arith.constant 16 : index
    %c0_42 = arith.constant 0 : index
    %68 = vector.load %arg8[%c16_41, %c0_42] : memref<72x256xf32, #tpu.memory_space<vmem>>, vector<8x256xf32>
    tpu.vector_store %arg8[%c16_41, %c0_42], %67 {strides = array<i32>} : memref<72x256xf32, #tpu.memory_space<vmem>>, vector<8x256xf32>,
    %c1_i32_43 = arith.constant 1 : i32
    %69 = tpu.dynamic_rotate %53 by %c1_i32_43 dim 1 : vector<8x256xf32>, i32 -> vector<8x256xf32>
    %c12_44 = arith.constant 12 : index
    %c0_45 = arith.constant 0 : index
    %70 = vector.load %arg2[%c12_44, %c0_45] : memref<18x256xf32, #tpu.memory_space<vmem>>, vector<1x256xf32>
    %71 = vector.broadcast %70 : vector<1x256xf32> to vector<8x256xf32>
    %72 = arith.mulf %69, %71 : vector<8x256xf32>
    %c24_46 = arith.constant 24 : index
    %c0_47 = arith.constant 0 : index
    %73 = vector.load %arg8[%c24_46, %c0_47] : memref<72x256xf32, #tpu.memory_space<vmem>>, vector<8x256xf32>
    tpu.vector_store %arg8[%c24_46, %c0_47], %72 {strides = array<i32>} : memref<72x256xf32, #tpu.memory_space<vmem>>, vector<8x256xf32>,
    %c13 = arith.constant 13 : index
    %c0_48 = arith.constant 0 : index
    %74 = vector.load %arg2[%c13, %c0_48] : memref<18x256xf32, #tpu.memory_space<vmem>>, vector<1x256xf32>
    %75 = vector.broadcast %74 : vector<1x256xf32> to vector<8x256xf32>
    %76 = arith.mulf %53, %75 : vector<8x256xf32>
    %c32_49 = arith.constant 32 : index
    %c0_50 = arith.constant 0 : index
    %77 = vector.load %arg8[%c32_49, %c0_50] : memref<72x256xf32, #tpu.memory_space<vmem>>, vector<8x256xf32>
    tpu.vector_store %arg8[%c32_49, %c0_50], %76 {strides = array<i32>} : memref<72x256xf32, #tpu.memory_space<vmem>>, vector<8x256xf32>,
    %c255_i32_51 = arith.constant 255 : i32
    %78 = tpu.dynamic_rotate %53 by %c255_i32_51 dim 1 : vector<8x256xf32>, i32 -> vector<8x256xf32>
    %c14 = arith.constant 14 : index
    %c0_52 = arith.constant 0 : index
    %79 = vector.load %arg2[%c14, %c0_52] : memref<18x256xf32, #tpu.memory_space<vmem>>, vector<1x256xf32>
    %80 = vector.broadcast %79 : vector<1x256xf32> to vector<8x256xf32>
    %81 = arith.mulf %78, %80 : vector<8x256xf32>
    %c40 = arith.constant 40 : index
    %c0_53 = arith.constant 0 : index
    %82 = vector.load %arg8[%c40, %c0_53] : memref<72x256xf32, #tpu.memory_space<vmem>>, vector<8x256xf32>
    tpu.vector_store %arg8[%c40, %c0_53], %81 {strides = array<i32>} : memref<72x256xf32, #tpu.memory_space<vmem>>, vector<8x256xf32>,
    %c241_i32_54 = arith.constant 241 : i32
    %83 = tpu.dynamic_rotate %53 by %c241_i32_54 dim 1 : vector<8x256xf32>, i32 -> vector<8x256xf32>
    %c15 = arith.constant 15 : index
    %c0_55 = arith.constant 0 : index
    %84 = vector.load %arg2[%c15, %c0_55] : memref<18x256xf32, #tpu.memory_space<vmem>>, vector<1x256xf32>
    %85 = vector.broadcast %84 : vector<1x256xf32> to vector<8x256xf32>
    %86 = arith.mulf %83, %85 : vector<8x256xf32>
    %c48 = arith.constant 48 : index
    %c0_56 = arith.constant 0 : index
    %87 = vector.load %arg8[%c48, %c0_56] : memref<72x256xf32, #tpu.memory_space<vmem>>, vector<8x256xf32>
    tpu.vector_store %arg8[%c48, %c0_56], %86 {strides = array<i32>} : memref<72x256xf32, #tpu.memory_space<vmem>>, vector<8x256xf32>,
    %c240_i32_57 = arith.constant 240 : i32
    %88 = tpu.dynamic_rotate %53 by %c240_i32_57 dim 1 : vector<8x256xf32>, i32 -> vector<8x256xf32>
    %c16_58 = arith.constant 16 : index
    %c0_59 = arith.constant 0 : index
    %89 = vector.load %arg2[%c16_58, %c0_59] : memref<18x256xf32, #tpu.memory_space<vmem>>, vector<1x256xf32>
    %90 = vector.broadcast %89 : vector<1x256xf32> to vector<8x256xf32>
    %91 = arith.mulf %88, %90 : vector<8x256xf32>
    %c56 = arith.constant 56 : index
    %c0_60 = arith.constant 0 : index
    %92 = vector.load %arg8[%c56, %c0_60] : memref<72x256xf32, #tpu.memory_space<vmem>>, vector<8x256xf32>
    tpu.vector_store %arg8[%c56, %c0_60], %91 {strides = array<i32>} : memref<72x256xf32, #tpu.memory_space<vmem>>, vector<8x256xf32>,
    %c239_i32_61 = arith.constant 239 : i32
    %93 = tpu.dynamic_rotate %53 by %c239_i32_61 dim 1 : vector<8x256xf32>, i32 -> vector<8x256xf32>
    %c17 = arith.constant 17 : index
    %c0_62 = arith.constant 0 : index
    %94 = vector.load %arg2[%c17, %c0_62] : memref<18x256xf32, #tpu.memory_space<vmem>>, vector<1x256xf32>
    %95 = vector.broadcast %94 : vector<1x256xf32> to vector<8x256xf32>
    %96 = arith.mulf %93, %95 : vector<8x256xf32>
    %c64 = arith.constant 64 : index
    %c0_63 = arith.constant 0 : index
    %97 = vector.load %arg8[%c64, %c0_63] : memref<72x256xf32, #tpu.memory_space<vmem>>, vector<8x256xf32>
    tpu.vector_store %arg8[%c64, %c0_63], %96 {strides = array<i32>} : memref<72x256xf32, #tpu.memory_space<vmem>>, vector<8x256xf32>,
    %c0_64 = arith.constant 0 : index
    %c0_65 = arith.constant 0 : index
    %98 = vector.load %arg5[%c0_64, %c0_65] : memref<8x72xf32, #tpu.memory_space<vmem>>, vector<8x72xf32>
    %c0_66 = arith.constant 0 : index
    %c0_67 = arith.constant 0 : index
    %99 = vector.load %arg6[%c0_66, %c0_67] : memref<8x1xf32, #tpu.memory_space<vmem>>, vector<8x1xf32>
    %c0_68 = arith.constant 0 : index
    %c0_69 = arith.constant 0 : index
    %100 = vector.load %arg8[%c0_68, %c0_69] : memref<72x256xf32, #tpu.memory_space<vmem>>, vector<72x256xf32>
    %cst_70 = arith.constant dense<0.000000e+00> : vector<8x256xf32>
    %101 = tpu.matmul %98, %100, %cst_70 {dimension_numbers = #tpu.dot_dimension_numbers<[1], [0], [0], [1], [0, 0, 1, 1], [], []>} : vector<8x72xf32>, vector<72x256xf32>, vector<8x256xf32> -> vector<8x256xf32>
    %102 = vector.broadcast %99 : vector<8x1xf32> to vector<8x256xf32>
    %103 = arith.addf %101, %102 : vector<8x256xf32>
    %c0_71 = arith.constant 0 : index
    %c0_72 = arith.constant 0 : index
    %c0_73 = arith.constant 0 : index
    %104 = vector.load %arg7[%c0_71, %c0_72, %c0_73] : memref<1x8x256xf32, #tpu.memory_space<vmem>>, vector<1x8x256xf32>
    %105 = vector.shape_cast %104 : vector<1x8x256xf32> to vector<8x256xf32>
    %106 = vector.shape_cast %103 : vector<8x256xf32> to vector<1x8x256xf32>
    tpu.vector_store %arg7[%c0_71, %c0_72, %c0_73], %106 {strides = array<i32>} : memref<1x8x256xf32, #tpu.memory_space<vmem>>, vector<1x8x256xf32>,
    return
  }
  func.func @transform_0(%arg0: i32) -> (i32, i32, i32) {
    %c0_i32 = arith.constant 0 : i32
    %c0_i32_0 = arith.constant 0 : i32
    %c0_i32_1 = arith.constant 0 : i32
    return %arg0, %c0_i32, %c0_i32_0 : i32, i32, i32
  }
  func.func @transform_1(%arg0: i32) -> (i32, i32) {
    %c0_i32 = arith.constant 0 : i32
    %c0_i32_0 = arith.constant 0 : i32
    %c0_i32_1 = arith.constant 0 : i32
    return %c0_i32, %c0_i32_0 : i32, i32
  }
  func.func @transform_2(%arg0: i32) -> (i32, i32) {
    %c0_i32 = arith.constant 0 : i32
    %c0_i32_0 = arith.constant 0 : i32
    %c0_i32_1 = arith.constant 0 : i32
    return %c0_i32, %c0_i32_0 : i32, i32
  }
  func.func @transform_3(%arg0: i32) -> (i32, i32) {
    %c0_i32 = arith.constant 0 : i32
    %c0_i32_0 = arith.constant 0 : i32
    %c0_i32_1 = arith.constant 0 : i32
    return %c0_i32, %c0_i32_0 : i32, i32
  }
  func.func @transform_4(%arg0: i32) -> (i32, i32) {
    %c0_i32 = arith.constant 0 : i32
    %c0_i32_0 = arith.constant 0 : i32
    %c0_i32_1 = arith.constant 0 : i32
    return %c0_i32, %c0_i32_0 : i32, i32
  }
  func.func @transform_5(%arg0: i32) -> (i32, i32) {
    %c0_i32 = arith.constant 0 : i32
    %c0_i32_0 = arith.constant 0 : i32
    %c0_i32_1 = arith.constant 0 : i32
    return %c0_i32, %c0_i32_0 : i32, i32
  }
  func.func @transform_6(%arg0: i32) -> (i32, i32, i32) {
    %c0_i32 = arith.constant 0 : i32
    %c0_i32_0 = arith.constant 0 : i32
    %c0_i32_1 = arith.constant 0 : i32
    return %arg0, %c0_i32, %c0_i32_0 : i32, i32, i32
  }
}

</mosaic_0001>

<llo_original>
// kernel: tpu_custom_call.1
$region0: #{tpu_custom_call.1}
  #allocation0 [shape = 'u32[]', space=smem, size = 0x4, offset = 0x4, fixed_abs, tag = 'smem constant byte address 0x4 - core index']
  #allocation1 [shape = 'u32[72,128]{1,0:T(1,128)}', space=vmem, size = 0x9000, scoped, tag = 'internal scratch']
  #allocation2 [shape = 'f32[72,256]{1,0:T(8,128)}', space=vmem, size = 0x12000, scoped, tag = 'scratch operand']
  %s0 = inlined_call_operand.vmem [shape: f32[2,4,256], index: 0, kind: input, shape index: {}]
  %s1 = inlined_call_operand.hbm [shape: f32[18,256], index: 1, kind: input, shape index: {}]
  %s2 = inlined_call_operand.hbm [shape: f32[8,36], index: 2, kind: input, shape index: {}]
  %s3 = inlined_call_operand.vmem [shape: f32[8,1], index: 3, kind: input, shape index: {}]
  %s4 = inlined_call_operand.hbm [shape: f32[8,72], index: 4, kind: input, shape index: {}]
  %s5 = inlined_call_operand.vmem [shape: f32[8,1], index: 5, kind: input, shape index: {}]
  %s6 = inlined_call_operand.hbm [shape: f32[2,8,256], index: 6, kind: output, shape index: {}]
  %s7 = sld [smem:[#allocation0]]
  $region69: #{tpu_custom_call.1} parent=0
    _
  %s9 = ssub.s32 1, %s7
  %s10 = scalar_select 0, %s9, %s7
  $region1: #{tpu_custom_call.1} parent=0
    #allocation3 [shape = 'u8[24576]{0}', space=vmem, size = 0x6000, scoped, tag = 'input window, operand 1, single buffered']
    #allocation4 [shape = 's32[2]{0}', space=sflag, size = 0x8, scoped, tag = 'scoped memory for tpu_custom_call.1']
    #allocation5 [shape = 's32[2]{0}', space=sflag, size = 0x8, scoped, tag = 'scoped memory for tpu_custom_call.1']
    #allocation6 [shape = 'u8[4096]{0}', space=vmem, size = 0x1000, scoped, tag = 'input window, operand 2, single buffered']
    #allocation7 [shape = 's32[1]{0}', space=sflag, size = 0x4, scoped, tag = 'scoped memory for tpu_custom_call.1']
    #allocation8 [shape = 'u8[4096]{0}', space=vmem, size = 0x1000, scoped, tag = 'input window, operand 4, single buffered']
    #allocation9 [shape = 'u8[16384]{0}', space=vmem, size = 0x4000, scoped, tag = 'output window, operand 0']
    %11 = vsyncpa [#allocation4], 0
    %12 = vsyncpa [#allocation7], 0
    %13 = vsyncpa [#allocation5], 0
    %s14 = scalar_lea.sflag [#allocation5], 1
    %15 = vsyncpa %s14, 0
    loop: start=0, step=1, limit=4
    $region2: #{tpu_custom_call.1} parent=1 // loop_pre_header
      _
    $region3: #{tpu_custom_call.1} parent=1 // loop_header
      %s17 = sphi 0, %s21
      %p18 = scmp.ge.s32.totalorder %s17, 4
      %s27 = sphi 0, %s29
      %s30 = sphi 0, %s27
      %s31 = sphi 0, %s30
      %s47 = sphi 0, %s31
      %s51 = sphi 0, %s51
      %s53 = sphi 0, %s51
      %s54 = sphi 0, %s53
      %s68 = sphi 0, %s54
      %s72 = sphi 0, %s72
      %s74 = sphi 0, %s72
      %s75 = sphi 0, %s74
      %s89 = sphi 0, %s75
      %s93 = sphi 0, %s93
      %s95 = sphi 0, %s93
      %s96 = sphi 0, %s95
      %s110 = sphi 0, %s96
      %s114 = sphi 0, %s114
      %s116 = sphi 0, %s114
      %s117 = sphi 0, %s116
      %s131 = sphi 0, %s117
      %s135 = sphi 0, %s135
      %s137 = sphi 0, %s135
      %s138 = sphi 0, %s137
      %s152 = sphi 0, %s138
      %s158 = sphi 0, %s160
      %s161 = sphi 0, %s158
      %s162 = sphi 0, %s161
      %s178 = sphi 0, %s162
    $region4: #{tpu_custom_call.1} parent=1 // loop_header_branch
      %20 = sbr.rel (%p18) target = $region8
    $region5: #{tpu_custom_call.1} parent=1 // loop_body
      %s22 = ssub.s32 %s17, 1
      %s23 = ssub.s32 %s17, 2
      %s24 = sadd.s32 %s17, 1
      %s25 = ssub.s32 %s17, %s24
      %p26 = scmp.eq.s32.totalorder %s25, 0
      %s28 = sadd.s32 %s27, 1
      %s29 = scalar_select %p26, %s27, %s28
      %p32 = pneg %p26
      %p33 = scmp.eq.s32.totalorder %s17, 1
      %p34 = por %p32, %p33
      %p35 = scmp.ne.s32.totalorder %s27, %s30
      %p36 = scmp.eq.s32.totalorder %s17, 0
      %p37 = por %p35, %p36
      %p38 = scmp.ne.s32.totalorder %s27, %s30
      %p39 = scmp.eq.s32.totalorder %s22, 1
      %p40 = por %p38, %p39
      %p41 = scmp.ne.s32.totalorder %s30, %s31
      %p42 = scmp.eq.s32.totalorder %s22, 0
      %p43 = por %p41, %p42
      %p44 = scmp.ne.s32.totalorder %s30, %s31
      %p45 = scmp.eq.s32.totalorder %s23, 1
      %p46 = por %p44, %p45
      %p48 = scmp.ne.s32.totalorder %s31, %s47
      %p49 = scmp.eq.s32.totalorder %s23, 0
      %p50 = por %p48, %p49
      %s52 = sadd.s32 %s51, 1
      %p55 = scmp.eq.s32.totalorder %s17, 1
      %p56 = scmp.ne.s32.totalorder %s51, %s53
      %p57 = scmp.eq.s32.totalorder %s17, 0
      %p58 = por %p56, %p57
      %p59 = scmp.ne.s32.totalorder %s51, %s53
      %p60 = scmp.eq.s32.totalorder %s22, 1
      %p61 = por %p59, %p60
      %p62 = scmp.ne.s32.totalorder %s53, %s54
      %p63 = scmp.eq.s32.totalorder %s22, 0
      %p64 = por %p62, %p63
      %p65 = scmp.ne.s32.totalorder %s53, %s54
      %p66 = scmp.eq.s32.totalorder %s23, 1
      %p67 = por %p65, %p66
      %p69 = scmp.ne.s32.totalorder %s54, %s68
      %p70 = scmp.eq.s32.totalorder %s23, 0
      %p71 = por %p69, %p70
      %s73 = sadd.s32 %s72, 1
      %p76 = scmp.eq.s32.totalorder %s17, 1
      %p77 = scmp.ne.s32.totalorder %s72, %s74
      %p78 = scmp.eq.s32.totalorder %s17, 0
      %p79 = por %p77, %p78
      %p80 = scmp.ne.s32.totalorder %s72, %s74
      %p81 = scmp.eq.s32.totalorder %s22, 1
      %p82 = por %p80, %p81
      %p83 = scmp.ne.s32.totalorder %s74, %s75
      %p84 = scmp.eq.s32.totalorder %s22, 0
      %p85 = por %p83, %p84
      %p86 = scmp.ne.s32.totalorder %s74, %s75
      %p87 = scmp.eq.s32.totalorder %s23, 1
      %p88 = por %p86, %p87
      %p90 = scmp.ne.s32.totalorder %s75, %s89
      %p91 = scmp.eq.s32.totalorder %s23, 0
      %p92 = por %p90, %p91
      %s94 = sadd.s32 %s93, 1
      %p97 = scmp.eq.s32.totalorder %s17, 1
      %p98 = scmp.ne.s32.totalorder %s93, %s95
      %p99 = scmp.eq.s32.totalorder %s17, 0
      %p100 = por %p98, %p99
      %p101 = scmp.ne.s32.totalorder %s93, %s95
      %p102 = scmp.eq.s32.totalorder %s22, 1
      %p103 = por %p101, %p102
      %p104 = scmp.ne.s32.totalorder %s95, %s96
      %p105 = scmp.eq.s32.totalorder %s22, 0
      %p106 = por %p104, %p105
      %p107 = scmp.ne.s32.totalorder %s95, %s96
      %p108 = scmp.eq.s32.totalorder %s23, 1
      %p109 = por %p107, %p108
      %p111 = scmp.ne.s32.totalorder %s96, %s110
      %p112 = scmp.eq.s32.totalorder %s23, 0
      %p113 = por %p111, %p112
      %s115 = sadd.s32 %s114, 1
      %p118 = scmp.eq.s32.totalorder %s17, 1
      %p119 = scmp.ne.s32.totalorder %s114, %s116
      %p120 = scmp.eq.s32.totalorder %s17, 0
      %p121 = por %p119, %p120
      %p122 = scmp.ne.s32.totalorder %s114, %s116
      %p123 = scmp.eq.s32.totalorder %s22, 1
      %p124 = por %p122, %p123
      %p125 = scmp.ne.s32.totalorder %s116, %s117
      %p126 = scmp.eq.s32.totalorder %s22, 0
      %p127 = por %p125, %p126
      %p128 = scmp.ne.s32.totalorder %s116, %s117
      %p129 = scmp.eq.s32.totalorder %s23, 1
      %p130 = por %p128, %p129
      %p132 = scmp.ne.s32.totalorder %s117, %s131
      %p133 = scmp.eq.s32.totalorder %s23, 0
      %p134 = por %p132, %p133
      %s136 = sadd.s32 %s135, 1
      %p139 = scmp.eq.s32.totalorder %s17, 1
      %p140 = scmp.ne.s32.totalorder %s135, %s137
      %p141 = scmp.eq.s32.totalorder %s17, 0
      %p142 = por %p140, %p141
      %p143 = scmp.ne.s32.totalorder %s135, %s137
      %p144 = scmp.eq.s32.totalorder %s22, 1
      %p145 = por %p143, %p144
      %p146 = scmp.ne.s32.totalorder %s137, %s138
      %p147 = scmp.eq.s32.totalorder %s22, 0
      %p148 = por %p146, %p147
      %p149 = scmp.ne.s32.totalorder %s137, %s138
      %p150 = scmp.eq.s32.totalorder %s23, 1
      %p151 = por %p149, %p150
      %p153 = scmp.ne.s32.totalorder %s138, %s152
      %p154 = scmp.eq.s32.totalorder %s23, 0
      %p155 = por %p153, %p154
      %s156 = ssub.s32 %s17, %s24
      %p157 = scmp.eq.s32.totalorder %s156, 0
      %s159 = sadd.s32 %s158, 1
      %s160 = scalar_select %p157, %s158, %s159
      %p163 = pneg %p157
      %p164 = scmp.eq.s32.totalorder %s17, 1
      %p165 = por %p163, %p164
      %p166 = scmp.ne.s32.totalorder %s158, %s161
      %p167 = scmp.eq.s32.totalorder %s17, 0
      %p168 = por %p166, %p167
      %p169 = scmp.ne.s32.totalorder %s158, %s161
      %p170 = scmp.eq.s32.totalorder %s22, 1
      %p171 = por %p169, %p170
      %p172 = scmp.ne.s32.totalorder %s161, %s162
      %p173 = scmp.eq.s32.totalorder %s22, 0
      %p174 = por %p172, %p173
      %p175 = scmp.ne.s32.totalorder %s161, %s162
      %p176 = scmp.eq.s32.totalorder %s23, 1
      %p177 = por %p175, %p176
      %p179 = scmp.ne.s32.totalorder %s162, %s178
      %p180 = scmp.eq.s32.totalorder %s23, 0
      %p181 = por %p179, %p180
      %p182 = scmp.le.s32.totalorder 1, %s17
      %p183 = scmp.lt.s32.totalorder %s17, 3
      %p184 = pnand %p182, %p183
      %p185 = pneg %p184
      // Predicated region
      $region9: #{tpu_custom_call.1} parent=5 // pred_check
        _
      $region10: #{tpu_custom_call.1} parent=5 // pred_check_branch
        %187 = sbr.rel (%p184) target = $region12
      $region11: #{tpu_custom_call.1} parent=5 // pred_region
        %s188 = ssub.s32 %s17, 1
        // Predicated region
        $region13: #{tpu_custom_call.1} parent=11 // pred_check
          %p189 = pneg %p64
        $region14: #{tpu_custom_call.1} parent=11 // pred_check_branch
          %191 = sbr.rel (%p189) target = $region16
        $region15: #{tpu_custom_call.1} parent=11 // pred_region
          %193 = vsyncadd [#allocation4], 0
          %s194 = sshll.u32 %s1, 4
          %s195 = int_to_ptr.hbm [resolvable:$true] %s194
          %s196 = sshll.u32 [#allocation3], 4
          %s197 = int_to_ptr.vmem [resolvable:$true] %s196
          %202 = dma.hbm_to_vmem [thread:$0]  %s195, 768, %s197, [#allocation4], 256, 256, 16
        $region16: #{tpu_custom_call.1} parent=11 // pred_fallthru
          _
        // Predicated region
        $region17: #{tpu_custom_call.1} parent=11 // pred_check
          %p203 = pneg %p85
        $region18: #{tpu_custom_call.1} parent=11 // pred_check_branch
          %205 = sbr.rel (%p203) target = $region20
        $region19: #{tpu_custom_call.1} parent=11 // pred_region
          %207 = vsyncadd [#allocation7], 0
          %s209 = sshll.u32 %s2, 4
          %s210 = int_to_ptr.hbm [resolvable:$true] %s209
          %s211 = sshll.u32 [#allocation6], 4
          %s212 = int_to_ptr.vmem [resolvable:$true] %s211
          %214 = dma.hbm_to_vmem [thread:$0]  %s210, 128, %s212, [#allocation7]
        $region20: #{tpu_custom_call.1} parent=11 // pred_fallthru
          _
        // Predicated region
        $region21: #{tpu_custom_call.1} parent=11 // pred_check
          %p215 = pneg %p106
        $region22: #{tpu_custom_call.1} parent=11 // pred_check_branch
          %217 = sbr.rel (%p215) target = $region24
        $region23: #{tpu_custom_call.1} parent=11 // pred_region
          _
        $region24: #{tpu_custom_call.1} parent=11 // pred_fallthru
          _
        // Predicated region
        $region25: #{tpu_custom_call.1} parent=11 // pred_check
          %p218 = pneg %p127
        $region26: #{tpu_custom_call.1} parent=11 // pred_check_branch
          %220 = sbr.rel (%p218) target = $region28
        $region27: #{tpu_custom_call.1} parent=11 // pred_region
          %222 = vsyncadd [#allocation7], 0
          %s224 = sshll.u32 %s4, 4
          %s225 = int_to_ptr.hbm [resolvable:$true] %s224
          %s226 = sshll.u32 [#allocation8], 4
          %s227 = int_to_ptr.vmem [resolvable:$true] %s226
          %229 = dma.hbm_to_vmem [thread:$0]  %s225, 128, %s227, [#allocation7]
        $region28: #{tpu_custom_call.1} parent=11 // pred_fallthru
          _
        // Predicated region
        $region29: #{tpu_custom_call.1} parent=11 // pred_check
          %p230 = pneg %p148
        $region30: #{tpu_custom_call.1} parent=11 // pred_check_branch
          %232 = sbr.rel (%p230) target = $region32
        $region31: #{tpu_custom_call.1} parent=11 // pred_region
          _
        $region32: #{tpu_custom_call.1} parent=11 // pred_fallthru
          _
      $region12: #{tpu_custom_call.1} parent=5 // pred_fallthru
        _
      %p233 = scmp.lt.s32.totalorder %s17, 2
      // Predicated region
      $region33: #{tpu_custom_call.1} parent=5 // pred_check
        %p234 = pneg %p233
      $region34: #{tpu_custom_call.1} parent=5 // pred_check_branch
        %236 = sbr.rel (%p234) target = $region36
      $region35: #{tpu_custom_call.1} parent=5 // pred_region
        // Predicated region
        $region37: #{tpu_custom_call.1} parent=35 // pred_check
          %p237 = pneg %p37
        $region38: #{tpu_custom_call.1} parent=35 // pred_check_branch
          %239 = sbr.rel (%p237) target = $region40
        $region39: #{tpu_custom_call.1} parent=35 // pred_region
          %p240 = scmp.lt.s32.totalorder %s17, 1
          %s241 = scalar_select %p240, %s17, 1
          %s242 = smul.addr %s241, 2
          %s243 = smul.addr %s242, 4
          %s244 = scalar_lea.vmem %s0, %s243
        $region40: #{tpu_custom_call.1} parent=35 // pred_fallthru
          _
      $region36: #{tpu_custom_call.1} parent=5 // pred_fallthru
        _
      %p245 = scmp.le.s32.totalorder 1, %s17
      %p246 = scmp.lt.s32.totalorder %s17, 3
      %p247 = pnand %p245, %p246
      %p248 = pneg %p247
      // Predicated region
      $region41: #{tpu_custom_call.1} parent=5 // pred_check
        _
      $region42: #{tpu_custom_call.1} parent=5 // pred_check_branch
        %250 = sbr.rel (%p247) target = $region44
      $region43: #{tpu_custom_call.1} parent=5 // pred_region
        %s251 = ssub.s32 %s17, 1
        // Predicated region
        $region45: #{tpu_custom_call.1} parent=43 // pred_check
          %p252 = pneg %p64
        $region46: #{tpu_custom_call.1} parent=43 // pred_check_branch
          %254 = sbr.rel (%p252) target = $region48
        $region47: #{tpu_custom_call.1} parent=43 // pred_region
          %256 = dma.done [#allocation4], 768
        $region48: #{tpu_custom_call.1} parent=43 // pred_fallthru
          _
        // Predicated region
        $region49: #{tpu_custom_call.1} parent=43 // pred_check
          %p257 = pneg %p85
        $region50: #{tpu_custom_call.1} parent=43 // pred_check_branch
          %259 = sbr.rel (%p257) target = $region52
        $region51: #{tpu_custom_call.1} parent=43 // pred_region
          %261 = dma.done [#allocation7], 128
        $region52: #{tpu_custom_call.1} parent=43 // pred_fallthru
          _
        // Predicated region
        $region53: #{tpu_custom_call.1} parent=43 // pred_check
          %p262 = pneg %p127
        $region54: #{tpu_custom_call.1} parent=43 // pred_check_branch
          %264 = sbr.rel (%p262) target = $region56
        $region55: #{tpu_custom_call.1} parent=43 // pred_region
          %266 = dma.done [#allocation7], 128
        $region56: #{tpu_custom_call.1} parent=43 // pred_fallthru
          _
        %p267 = scmp.lt.s32.totalorder %s22, 1
        %s268 = scalar_select %p267, %s22, 1
        %s269 = smul.addr %s268, 2
        %s270 = smul.addr %s269, 4
        %s271 = scalar_lea.vmem %s0, %s270
        %p272 = pneg %p43
        %p273 = pneg %p40
        %p274 = pneg %p64
        %p275 = pneg %p61
        %p276 = pneg %p85
        %p277 = pneg %p82
        %p278 = pneg %p106
        %p279 = pneg %p103
        %p280 = pneg %p127
        %p281 = pneg %p124
        %p282 = pneg %p148
        %p283 = pneg %p145
        %p284 = pneg %p174
        %p285 = pneg %p171
        %s286 = sand.u32 %s161, 1
        %s287 = scalar_lea.sflag [#allocation5], %s286
        %s288 = sand.u32 %s161, 1
        %s289 = smul.addr %s288, 16
        %s290 = scalar_lea.vmem [#allocation9], %s289
        %p291 = scmp.lt.s32.totalorder %s22, 1
        %s292 = scalar_select %p291, %s22, 1
        %s293 = smul.addr %s292, 2
        %s294 = smul.addr %s293, 4
        %s295 = scalar_lea.vmem %s0, %s294
        %v296 = vld [vmem:[%s295] sm:$0xff]
        %298 = vst [vmem:[#allocation1] ss:$2 sm:$0xff] %v296
        %v299 = vld.sshfl [vmem:[#allocation1] sm:$0xff pattern:$0x75316420]
        %v300 = vld.sshfl [vmem:[#allocation1 + $0x8] sm:$0xff pattern:$0x75316420]
        %303 = vrot.lane.b32.xlu0 %v299, 17
        %v304 = vpop.permute.xlu0 %303
        %305 = vrot.lane.b32.xlu0 %v300, 17
        %v306 = vpop.permute.xlu0 %305
        %v307 = vlaneseq
        %v308 = vand.u32 %v307, 127
        %vm309 = vcmp.lt.s32.totalorder %v308, 17
        %v310 = vsel %vm309, %v304, %v306
        %v311 = vsel %vm309, %v306, %v304
        %v312 = vld [vmem:[#allocation3] ss:$8 sm:$0x3]
        %v314 = vperm.slane %v312, 0
        %v315 = vperm.slane %v312, 1
        %v318 = vmul.f32 %v311, %v314
        %v319 = vmul.f32 %v310, %v315
        %320 = vst [vmem:[#allocation2] sm:$0xf] %v318
        %321 = vst [vmem:[#allocation2 + $0x8] sm:$0xf] %v319
        %322 = vst [vmem:[#allocation1] ss:$2 sm:$0xff] %v296
        %v323 = vld.sshfl [vmem:[#allocation1] sm:$0xff pattern:$0x75316420]
        %v324 = vld.sshfl [vmem:[#allocation1 + $0x8] sm:$0xff pattern:$0x75316420]
        %327 = vrot.lane.b32.xlu0 %v323, 16
        %v328 = vpop.permute.xlu0 %327
        %329 = vrot.lane.b32.xlu0 %v324, 16
        %v330 = vpop.permute.xlu0 %329
        %vm331 = vcmp.lt.s32.totalorder %v308, 16
        %v332 = vsel %vm331, %v328, %v330
        %v333 = vsel %vm331, %v330, %v328
        %s334 = scalar_lea.vmem [#allocation3], 1
        %v335 = vld [vmem:[%s334] ss:$8 sm:$0x3]
        %v337 = vperm.slane %v335, 0
        %v338 = vperm.slane %v335, 1
        %v341 = vmul.f32 %v333, %v337
        %v342 = vmul.f32 %v332, %v338
        %v345 = vrot.slane %v341, 4
        %v346 = vrot.slane %v342, 4
        %349 = vst [vmem:[#allocation2] sm:$0xf0] %v345
        %350 = vst [vmem:[#allocation2 + $0x8] sm:$0xf0] %v346
        %351 = vst [vmem:[#allocation1] ss:$2 sm:$0xff] %v296
        %v352 = vld.sshfl [vmem:[#allocation1] sm:$0xff pattern:$0x75316420]
        %v353 = vld.sshfl [vmem:[#allocation1 + $0x8] sm:$0xff pattern:$0x75316420]
        %356 = vrot.lane.b32.xlu0 %v352, 15
        %v357 = vpop.permute.xlu0 %356
        %358 = vrot.lane.b32.xlu0 %v353, 15
        %v359 = vpop.permute.xlu0 %358
        %vm360 = vcmp.lt.s32.totalorder %v308, 15
        %v361 = vsel %vm360, %v357, %v359
        %v362 = vsel %vm360, %v359, %v357
        %s363 = scalar_lea.vmem [#allocation3], 2
        %v364 = vld [vmem:[%s363] ss:$8 sm:$0x3]
        %v366 = vperm.slane %v364, 0
        %v367 = vperm.slane %v364, 1
        %v370 = vmul.f32 %v362, %v366
        %v371 = vmul.f32 %v361, %v367
        %372 = vst [vmem:[#allocation2 + $0x10] sm:$0xf] %v370
        %373 = vst [vmem:[#allocation2 + $0x18] sm:$0xf] %v371
        %374 = vst [vmem:[#allocation1] ss:$2 sm:$0xff] %v296
        %v375 = vld.sshfl [vmem:[#allocation1] sm:$0xff pattern:$0x75316420]
        %v376 = vld.sshfl [vmem:[#allocation1 + $0x8] sm:$0xff pattern:$0x75316420]
        %379 = vrot.lane.b32.xlu0 %v375, 1
        %v380 = vpop.permute.xlu0 %379
        %381 = vrot.lane.b32.xlu0 %v376, 1
        %v382 = vpop.permute.xlu0 %381
        %vm383 = vcmp.lt.s32.totalorder %v308, 1
        %v384 = vsel %vm383, %v380, %v382
        %v385 = vsel %vm383, %v382, %v380
        %s386 = scalar_lea.vmem [#allocation3], 3
        %v387 = vld [vmem:[%s386] ss:$8 sm:$0x3]
        %v389 = vperm.slane %v387, 0
        %v390 = vperm.slane %v387, 1
        %v393 = vmul.f32 %v385, %v389
        %v394 = vmul.f32 %v384, %v390
        %v397 = vrot.slane %v393, 4
        %v398 = vrot.slane %v394, 4
        %401 = vst [vmem:[#allocation2 + $0x10] sm:$0xf0] %v397
        %402 = vst [vmem:[#allocation2 + $0x18] sm:$0xf0] %v398
        %s403 = scalar_lea.vmem [#allocation3], 4
        %v404 = vld [vmem:[%s403] ss:$8 sm:$0x3]
        %v406 = vperm.slane %v404, 0
        %v407 = vperm.slane %v404, 1
        %v408 = vrot.slane %v407, 4
        %vm409 = vcmask 1043456
        %v410 = vsel %vm409, %v406, %v408
        %v412 = vmul.f32 %v296, %v410
        %414 = vst [vmem:[#allocation1] ss:$2 sm:$0xff] %v412
        %v415 = vld.sshfl [vmem:[#allocation1] sm:$0xff pattern:$0x75316420]
        %v416 = vld.sshfl [vmem:[#allocation1 + $0x8] sm:$0xff pattern:$0x75316420]
        %419 = vst [vmem:[#allocation2 + $0x20] sm:$0xf] %v415
        %420 = vst [vmem:[#allocation2 + $0x28] sm:$0xf] %v416
        %421 = vst [vmem:[#allocation1] ss:$2 sm:$0xff] %v296
        %v422 = vld.sshfl [vmem:[#allocation1] sm:$0xff pattern:$0x75316420]
        %v423 = vld.sshfl [vmem:[#allocation1 + $0x8] sm:$0xff pattern:$0x75316420]
        %426 = vrot.lane.b32.xlu0 %v422, 127
        %v427 = vpop.permute.xlu0 %426
        %428 = vrot.lane.b32.xlu0 %v423, 127
        %v429 = vpop.permute.xlu0 %428
        %vm430 = vcmp.lt.s32.totalorder %v308, 127
        %v431 = vsel %vm430, %v427, %v429
        %v432 = vsel %vm430, %v429, %v427
        %s433 = scalar_lea.vmem [#allocation3], 5
        %v434 = vld [vmem:[%s433] ss:$8 sm:$0x3]
        %v436 = vperm.slane %v434, 0
        %v437 = vperm.slane %v434, 1
        %v440 = vmul.f32 %v431, %v436
        %v441 = vmul.f32 %v432, %v437
        %v444 = vrot.slane %v440, 4
        %v445 = vrot.slane %v441, 4
        %448 = vst [vmem:[#allocation2 + $0x20] sm:$0xf0] %v444
        %449 = vst [vmem:[#allocation2 + $0x28] sm:$0xf0] %v445
        %450 = vst [vmem:[#allocation1] ss:$2 sm:$0xff] %v296
        %v451 = vld.sshfl [vmem:[#allocation1] sm:$0xff pattern:$0x75316420]
        %v452 = vld.sshfl [vmem:[#allocation1 + $0x8] sm:$0xff pattern:$0x75316420]
        %455 = vrot.lane.b32.xlu0 %v451, 113
        %v456 = vpop.permute.xlu0 %455
        %457 = vrot.lane.b32.xlu0 %v452, 113
        %v458 = vpop.permute.xlu0 %457
        %vm459 = vcmp.lt.s32.totalorder %v308, 113
        %v460 = vsel %vm459, %v456, %v458
        %v461 = vsel %vm459, %v458, %v456
        %s462 = scalar_lea.vmem [#allocation3], 6
        %v463 = vld [vmem:[%s462] ss:$8 sm:$0x3]
        %v465 = vperm.slane %v463, 0
        %v466 = vperm.slane %v463, 1
        %v469 = vmul.f32 %v460, %v465
        %v470 = vmul.f32 %v461, %v466
        %471 = vst [vmem:[#allocation2 + $0x30] sm:$0xf] %v469
        %472 = vst [vmem:[#allocation2 + $0x38] sm:$0xf] %v470
        %473 = vst [vmem:[#allocation1] ss:$2 sm:$0xff] %v296
        %v474 = vld.sshfl [vmem:[#allocation1] sm:$0xff pattern:$0x75316420]
        %v475 = vld.sshfl [vmem:[#allocation1 + $0x8] sm:$0xff pattern:$0x75316420]
        %478 = vrot.lane.b32.xlu0 %v474, 112
        %v479 = vpop.permute.xlu0 %478
        %480 = vrot.lane.b32.xlu0 %v475, 112
        %v481 = vpop.permute.xlu0 %480
        %vm482 = vcmp.lt.s32.totalorder %v308, 112
        %v483 = vsel %vm482, %v479, %v481
        %v484 = vsel %vm482, %v481, %v479
        %s485 = scalar_lea.vmem [#allocation3], 7
        %v486 = vld [vmem:[%s485] ss:$8 sm:$0x3]
        %v488 = vperm.slane %v486, 0
        %v489 = vperm.slane %v486, 1
        %v492 = vmul.f32 %v483, %v488
        %v493 = vmul.f32 %v484, %v489
        %v496 = vrot.slane %v492, 4
        %v497 = vrot.slane %v493, 4
        %500 = vst [vmem:[#allocation2 + $0x30] sm:$0xf0] %v496
        %501 = vst [vmem:[#allocation2 + $0x38] sm:$0xf0] %v497
        %502 = vst [vmem:[#allocation1] ss:$2 sm:$0xff] %v296
        %v503 = vld.sshfl [vmem:[#allocation1] sm:$0xff pattern:$0x75316420]
        %v504 = vld.sshfl [vmem:[#allocation1 + $0x8] sm:$0xff pattern:$0x75316420]
        %507 = vrot.lane.b32.xlu0 %v503, 111
        %v508 = vpop.permute.xlu0 %507
        %509 = vrot.lane.b32.xlu0 %v504, 111
        %v510 = vpop.permute.xlu0 %509
        %vm511 = vcmp.lt.s32.totalorder %v308, 111
        %v512 = vsel %vm511, %v508, %v510
        %v513 = vsel %vm511, %v510, %v508
        %s514 = scalar_lea.vmem [#allocation3], 16
        %v515 = vld [vmem:[%s514] ss:$8 sm:$0x3]
        %v517 = vperm.slane %v515, 0
        %v518 = vperm.slane %v515, 1
        %v521 = vmul.f32 %v512, %v517
        %v522 = vmul.f32 %v513, %v518
        %523 = vst [vmem:[#allocation2 + $0x40] sm:$0xf] %v521
        %524 = vst [vmem:[#allocation2 + $0x48] sm:$0xf] %v522
        %v525 = vld [vmem:[#allocation6] sm:$0xff]
        %v526 = vld [vmem:[%s3] sm:$0xff]
        %v527 = vld [vmem:[#allocation2] sm:$0xff]
        %v528 = vld [vmem:[#allocation2 + $0x8] sm:$0xff]
        %v529 = vld [vmem:[#allocation2 + $0x10] sm:$0xff]
        %v530 = vld [vmem:[#allocation2 + $0x18] sm:$0xff]
        %v531 = vld [vmem:[#allocation2 + $0x20] sm:$0xff]
        %v532 = vld [vmem:[#allocation2 + $0x28] sm:$0xff]
        %v533 = vld [vmem:[#allocation2 + $0x30] sm:$0xff]
        %v534 = vld [vmem:[#allocation2 + $0x38] sm:$0xff]
        %v535 = vld [vmem:[#allocation2 + $0x40] sm:$0xf]
        %v536 = vld [vmem:[#allocation2 + $0x48] sm:$0xf]
        %538 = vset.pattern.permute.xlu0 0
        %539 = vperm.xlu0 %538, %v526
        %v540 = vpop.permute.xlu0 %539
        %vm542 = vcmask 293888
        %v544 = vsel %vm542, %v525, 0
        %v547 = vsel %vm409, %v535, 0
        %v550 = vsel %vm409, %v536, 0
        %552 = vmatpush.msra.mxu0 0.0
        %553 = vmatpush.msra.mxu0 0.0
        %554 = vmatpush.msra.mxu0 0.0
        %555 = vmatpush.msra.mxu0 0.0
        %556 = vmatpush.msra.mxu0 0.0
        %557 = vmatpush.msra.mxu0 0.0
        %558 = vmatpush.msra.mxu0 0.0
        %559 = vmatpush.msra.mxu0 0.0
        %560 = vmatpush.msra.mxu0 0.0
        %561 = vmatpush.msra.mxu0 0.0
        %562 = vmatpush.msra.mxu0 0.0
        %563 = vmatpush.msra.mxu0 %v547
        %564 = vmatpush.msra.mxu0 %v533
        %565 = vmatpush.msra.mxu0 %v531
        %566 = vmatpush.msra.mxu0 %v529
        %567 = vmatpush.msra.mxu0 %v527
        %568 = vmatmul.f32.gmra.mxu0 %v544
        %v569 = vpop.f32.mrf.mxu0
        %v570 = vadd.f32 %v540, %v569
        %571 = vdwg.mxu0
        %572 = vmatpush.msra.mxu0 0.0
        %573 = vmatpush.msra.mxu0 0.0
        %574 = vmatpush.msra.mxu0 0.0
        %575 = vmatpush.msra.mxu0 0.0
        %576 = vmatpush.msra.mxu0 0.0
        %577 = vmatpush.msra.mxu0 0.0
        %578 = vmatpush.msra.mxu0 0.0
        %579 = vmatpush.msra.mxu0 0.0
        %580 = vmatpush.msra.mxu0 0.0
        %581 = vmatpush.msra.mxu0 0.0
        %582 = vmatpush.msra.mxu0 0.0
        %583 = vmatpush.msra.mxu0 %v550
        %584 = vmatpush.msra.mxu0 %v534
        %585 = vmatpush.msra.mxu0 %v532
        %586 = vmatpush.msra.mxu0 %v530
        %587 = vmatpush.msra.mxu0 %v528
        %588 = vmatmul.f32.gmra.mxu0 %v544
        %v589 = vpop.f32.mrf.mxu0
        %v590 = vadd.f32 %v540, %v589
        %591 = vdwg.mxu0
        %v592 = vmax.f32 %v570, 0.0
        %v593 = vmax.f32 %v590, 0.0
        %594 = vrot.lane.b32.xlu0 %v592, 17
        %v595 = vpop.permute.xlu0 %594
        %596 = vrot.lane.b32.xlu0 %v593, 17
        %v597 = vpop.permute.xlu0 %596
        %v598 = vsel %vm309, %v595, %v597
        %v599 = vsel %vm309, %v597, %v595
        %s600 = scalar_lea.vmem [#allocation3], 17
        %v601 = vld [vmem:[%s600] ss:$8 sm:$0x3]
        %v603 = vperm.slane %v601, 0
        %v604 = vperm.slane %v601, 1
        %v607 = vmul.f32 %v599, %v603
        %v608 = vmul.f32 %v598, %v604
        %609 = vst [vmem:[#allocation2] sm:$0xff] %v607
        %610 = vst [vmem:[#allocation2 + $0x8] sm:$0xff] %v608
        %611 = vrot.lane.b32.xlu0 %v592, 16
        %v612 = vpop.permute.xlu0 %611
        %613 = vrot.lane.b32.xlu0 %v593, 16
        %v614 = vpop.permute.xlu0 %613
        %v615 = vsel %vm331, %v612, %v614
        %v616 = vsel %vm331, %v614, %v612
        %s617 = scalar_lea.vmem [#allocation3], 18
        %v618 = vld [vmem:[%s617] ss:$8 sm:$0x3]
        %v620 = vperm.slane %v618, 0
        %v621 = vperm.slane %v618, 1
        %v624 = vmul.f32 %v616, %v620
        %v625 = vmul.f32 %v615, %v621
        %626 = vst [vmem:[#allocation2 + $0x10] sm:$0xff] %v624
        %627 = vst [vmem:[#allocation2 + $0x18] sm:$0xff] %v625
        %628 = vrot.lane.b32.xlu0 %v592, 15
        %v629 = vpop.permute.xlu0 %628
        %630 = vrot.lane.b32.xlu0 %v593, 15
        %v631 = vpop.permute.xlu0 %630
        %v632 = vsel %vm360, %v629, %v631
        %v633 = vsel %vm360, %v631, %v629
        %s634 = scalar_lea.vmem [#allocation3], 19
        %v635 = vld [vmem:[%s634] ss:$8 sm:$0x3]
        %v637 = vperm.slane %v635, 0
        %v638 = vperm.slane %v635, 1
        %v641 = vmul.f32 %v633, %v637
        %v642 = vmul.f32 %v632, %v638
        %643 = vst [vmem:[#allocation2 + $0x20] sm:$0xff] %v641
        %644 = vst [vmem:[#allocation2 + $0x28] sm:$0xff] %v642
        %645 = vrot.lane.b32.xlu0 %v592, 1
        %v646 = vpop.permute.xlu0 %645
        %647 = vrot.lane.b32.xlu0 %v593, 1
        %v648 = vpop.permute.xlu0 %647
        %v649 = vsel %vm383, %v646, %v648
        %v650 = vsel %vm383, %v648, %v646
        %s651 = scalar_lea.vmem [#allocation3], 20
        %v652 = vld [vmem:[%s651] ss:$8 sm:$0x3]
        %v654 = vperm.slane %v652, 0
        %v655 = vperm.slane %v652, 1
        %v658 = vmul.f32 %v650, %v654
        %v659 = vmul.f32 %v649, %v655
        %660 = vst [vmem:[#allocation2 + $0x30] sm:$0xff] %v658
        %661 = vst [vmem:[#allocation2 + $0x38] sm:$0xff] %v659
        %s662 = scalar_lea.vmem [#allocation3], 21
        %v663 = vld [vmem:[%s662] ss:$8 sm:$0x3]
        %v665 = vperm.slane %v663, 0
        %v666 = vperm.slane %v663, 1
        %v669 = vmul.f32 %v592, %v665
        %v670 = vmul.f32 %v593, %v666
        %671 = vst [vmem:[#allocation2 + $0x40] sm:$0xff] %v669
        %672 = vst [vmem:[#allocation2 + $0x48] sm:$0xff] %v670
        %673 = vrot.lane.b32.xlu0 %v592, 127
        %v674 = vpop.permute.xlu0 %673
        %675 = vrot.lane.b32.xlu0 %v593, 127
        %v676 = vpop.permute.xlu0 %675
        %v677 = vsel %vm430, %v674, %v676
        %v678 = vsel %vm430, %v676, %v674
        %s679 = scalar_lea.vmem [#allocation3], 22
        %v680 = vld [vmem:[%s679] ss:$8 sm:$0x3]
        %v682 = vperm.slane %v680, 0
        %v683 = vperm.slane %v680, 1
        %v686 = vmul.f32 %v677, %v682
        %v687 = vmul.f32 %v678, %v683
        %688 = vst [vmem:[#allocation2 + $0x50] sm:$0xff] %v686
        %689 = vst [vmem:[#allocation2 + $0x58] sm:$0xff] %v687
        %690 = vrot.lane.b32.xlu0 %v592, 113
        %v691 = vpop.permute.xlu0 %690
        %692 = vrot.lane.b32.xlu0 %v593, 113
        %v693 = vpop.permute.xlu0 %692
        %v694 = vsel %vm459, %v691, %v693
        %v695 = vsel %vm459, %v693, %v691
        %s696 = scalar_lea.vmem [#allocation3], 23
        %v697 = vld [vmem:[%s696] ss:$8 sm:$0x3]
        %v699 = vperm.slane %v697, 0
        %v700 = vperm.slane %v697, 1
        %v703 = vmul.f32 %v694, %v699
        %v704 = vmul.f32 %v695, %v700
        %705 = vst [vmem:[#allocation2 + $0x60] sm:$0xff] %v703
        %706 = vst [vmem:[#allocation2 + $0x68] sm:$0xff] %v704
        %707 = vrot.lane.b32.xlu0 %v592, 112
        %v708 = vpop.permute.xlu0 %707
        %709 = vrot.lane.b32.xlu0 %v593, 112
        %v710 = vpop.permute.xlu0 %709
        %v711 = vsel %vm482, %v708, %v710
        %v712 = vsel %vm482, %v710, %v708
        %s713 = scalar_lea.vmem [#allocation3], 32
        %v714 = vld [vmem:[%s713] ss:$8 sm:$0x3]
        %v716 = vperm.slane %v714, 0
        %v717 = vperm.slane %v714, 1
        %v720 = vmul.f32 %v711, %v716
        %v721 = vmul.f32 %v712, %v717
        %722 = vst [vmem:[#allocation2 + $0x70] sm:$0xff] %v720
        %723 = vst [vmem:[#allocation2 + $0x78] sm:$0xff] %v721
        %724 = vrot.lane.b32.xlu0 %v592, 111
        %v725 = vpop.permute.xlu0 %724
        %726 = vrot.lane.b32.xlu0 %v593, 111
        %v727 = vpop.permute.xlu0 %726
        %v728 = vsel %vm511, %v725, %v727
        %v729 = vsel %vm511, %v727, %v725
        %s730 = scalar_lea.vmem [#allocation3], 33
        %v731 = vld [vmem:[%s730] ss:$8 sm:$0x3]
        %v733 = vperm.slane %v731, 0
        %v734 = vperm.slane %v731, 1
        %v737 = vmul.f32 %v728, %v733
        %v738 = vmul.f32 %v729, %v734
        %739 = vst [vmem:[#allocation2 + $0x80] sm:$0xff] %v737
        %740 = vst [vmem:[#allocation2 + $0x88] sm:$0xff] %v738
        %v741 = vld [vmem:[#allocation8] sm:$0xff]
        %v742 = vld [vmem:[%s5] sm:$0xff]
        %v743 = vld [vmem:[#allocation2] sm:$0xff]
        %v744 = vld [vmem:[#allocation2 + $0x8] sm:$0xff]
        %v745 = vld [vmem:[#allocation2 + $0x10] sm:$0xff]
        %v746 = vld [vmem:[#allocation2 + $0x18] sm:$0xff]
        %v747 = vld [vmem:[#allocation2 + $0x20] sm:$0xff]
        %v748 = vld [vmem:[#allocation2 + $0x28] sm:$0xff]
        %v749 = vld [vmem:[#allocation2 + $0x30] sm:$0xff]
        %v750 = vld [vmem:[#allocation2 + $0x38] sm:$0xff]
        %v751 = vld [vmem:[#allocation2 + $0x40] sm:$0xff]
        %v752 = vld [vmem:[#allocation2 + $0x48] sm:$0xff]
        %v753 = vld [vmem:[#allocation2 + $0x50] sm:$0xff]
        %v754 = vld [vmem:[#allocation2 + $0x58] sm:$0xff]
        %v755 = vld [vmem:[#allocation2 + $0x60] sm:$0xff]
        %v756 = vld [vmem:[#allocation2 + $0x68] sm:$0xff]
        %v757 = vld [vmem:[#allocation2 + $0x70] sm:$0xff]
        %v758 = vld [vmem:[#allocation2 + $0x78] sm:$0xff]
        %v759 = vld [vmem:[#allocation2 + $0x80] sm:$0xff]
        %v760 = vld [vmem:[#allocation2 + $0x88] sm:$0xff]
        %762 = vset.pattern.permute.xlu0 0
        %763 = vperm.xlu0 %762, %v742
        %v764 = vpop.permute.xlu0 %763
        %vm766 = vcmask 588800
        %v768 = vsel %vm766, %v741, 0
        %770 = vmatpush.msra.mxu0 0.0
        %771 = vmatpush.msra.mxu0 0.0
        %772 = vmatpush.msra.mxu0 0.0
        %773 = vmatpush.msra.mxu0 0.0
        %774 = vmatpush.msra.mxu0 0.0
        %775 = vmatpush.msra.mxu0 0.0
        %776 = vmatpush.msra.mxu0 0.0
        %777 = vmatpush.msra.mxu0 %v759
        %778 = vmatpush.msra.mxu0 %v757
        %779 = vmatpush.msra.mxu0 %v755
        %780 = vmatpush.msra.mxu0 %v753
        %781 = vmatpush.msra.mxu0 %v751
        %782 = vmatpush.msra.mxu0 %v749
        %783 = vmatpush.msra.mxu0 %v747
        %784 = vmatpush.msra.mxu0 %v745
        %785 = vmatpush.msra.mxu0 %v743
        %786 = vmatmul.f32.gmra.mxu0 %v768
        %v787 = vpop.f32.mrf.mxu0
        %v788 = vadd.f32 %v764, %v787
        %789 = vdwg.mxu0
        %790 = vmatpush.msra.mxu0 0.0
        %791 = vmatpush.msra.mxu0 0.0
        %792 = vmatpush.msra.mxu0 0.0
        %793 = vmatpush.msra.mxu0 0.0
        %794 = vmatpush.msra.mxu0 0.0
        %795 = vmatpush.msra.mxu0 0.0
        %796 = vmatpush.msra.mxu0 0.0
        %797 = vmatpush.msra.mxu0 %v760
        %798 = vmatpush.msra.mxu0 %v758
        %799 = vmatpush.msra.mxu0 %v756
        %800 = vmatpush.msra.mxu0 %v754
        %801 = vmatpush.msra.mxu0 %v752
        %802 = vmatpush.msra.mxu0 %v750
        %803 = vmatpush.msra.mxu0 %v748
        %804 = vmatpush.msra.mxu0 %v746
        %805 = vmatpush.msra.mxu0 %v744
        %806 = vmatmul.f32.gmra.mxu0 %v768
        %v807 = vpop.f32.mrf.mxu0
        %v808 = vadd.f32 %v764, %v807
        %809 = vdwg.mxu0
        %810 = vst [vmem:[%s290] sm:$0xff] %v788
        %811 = vst [vmem:[%s290 + $0x8] sm:$0xff] %v808
        %s812 = sand.u32 %s161, 1
        %s813 = scalar_lea.sflag [#allocation5], %s812
        %s814 = sand.u32 %s161, 1
        %s815 = smul.addr %s814, 16
        %s816 = scalar_lea.vmem [#allocation9], %s815
        // Predicated region
        $region57: #{tpu_custom_call.1} parent=43 // pred_check
          %p817 = pneg %p171
        $region58: #{tpu_custom_call.1} parent=43 // pred_check_branch
          %819 = sbr.rel (%p817) target = $region60
        $region59: #{tpu_custom_call.1} parent=43 // pred_region
          %821 = vsyncadd %s813, 0
          %s822 = smul.addr %s22, 2
          %s823 = smul.addr %s822, 8
          %s824 = scalar_lea.hbm %s6, %s823
          %s826 = sshll.u32 %s816, 4
          %s827 = int_to_ptr.vmem [resolvable:$true] %s826
          %s828 = sshll.u32 %s824, 4
          %s829 = int_to_ptr.hbm [resolvable:$true] %s828
          %831 = dma.vmem_to_hbm [thread:$0]  %s827, 256, %s829, %s813
        $region60: #{tpu_custom_call.1} parent=43 // pred_fallthru
          _
      $region44: #{tpu_custom_call.1} parent=5 // pred_fallthru
        _
      %p832 = scmp.le.s32.totalorder 2, %s17
      // Predicated region
      $region61: #{tpu_custom_call.1} parent=5 // pred_check
        %p833 = pneg %p832
      $region62: #{tpu_custom_call.1} parent=5 // pred_check_branch
        %835 = sbr.rel (%p833) target = $region64
      $region63: #{tpu_custom_call.1} parent=5 // pred_region
        %s836 = ssub.s32 %s17, 2
        // Predicated region
        $region65: #{tpu_custom_call.1} parent=63 // pred_check
          %p837 = pneg %p177
        $region66: #{tpu_custom_call.1} parent=63 // pred_check_branch
          %839 = sbr.rel (%p837) target = $region68
        $region67: #{tpu_custom_call.1} parent=63 // pred_region
          %s840 = sand.u32 %s162, 1
          %s841 = scalar_lea.sflag [#allocation5], %s840
          %s842 = sand.u32 %s162, 1
          %s843 = smul.addr %s842, 16
          %s844 = scalar_lea.vmem [#allocation9], %s843
          %846 = dma.done %s841, 256
        $region68: #{tpu_custom_call.1} parent=63 // pred_fallthru
          _
      $region64: #{tpu_custom_call.1} parent=5 // pred_fallthru
        _
    $region6: #{tpu_custom_call.1} parent=1 // loop_footer
      %s21 = sadd.s32 1, %s17
    $region7: #{tpu_custom_call.1} parent=1 // loop_footer_branch
      %16 = sbr.rel target = $region3
    $region8: #{tpu_custom_call.1} parent=1 // loop_exit
      _
    %847 = vsyncpa [#allocation4], 1
    %s848 = scalar_lea.sflag [#allocation4], 1
    %849 = vsyncpa %s848, 1
    %850 = vsyncpa [#allocation7], 1
    %851 = vsyncpa [#allocation5], 1
    %s852 = scalar_lea.sflag [#allocation5], 1
    %853 = vsyncpa %s852, 1

</llo_original>
